<compile_context>
chip_gen: v5e
topology: v5e:2x2
jax: 0.10.0
libtpu: 0.0.40
codegen_flags: <defaults>
</compile_context>

<pallas_src>
import jax
import jax.numpy as jnp
import numpy as np
from jax import lax
from jax.experimental import pallas as pl
from jax.experimental.pallas import tpu as pltpu


def _round_up(x, m):
    return (x + m - 1) // m * m


def _vmem_capacity_bytes():
    try:
        return int(pltpu.get_tpu_info().vmem_capacity_bytes)
    except Exception:
        return 64 * 1024 * 1024  # conservative: v7x per-TensorCore VMEM


def _pick_row_tile(H, W, Cin, Cout_p, vmem_budget):
    """Even row-tile height tH: big enough to fill the MXU M dim (target tH*W up
    to ~2048), small enough that double-buffered blocks + im2col patch fit the
    VMEM budget, and (when the image allows) >= 2 tiles per image so the
    pipeline has multiple steps and v7x can split rows across TensorCores."""
    def step_bytes(t):
        m = t * W
        return (2 * (t + 2) * (W + 2) * Cin * 2      # bf16 input blocks (x2 buffers)
                + 2 * t * W * Cout_p * 4             # f32 output blocks (x2 buffers)
                + 9 * Cin * Cout_p * 2               # resident bf16 weight slab
                + m * (9 * Cin + Cout_p) * 4)        # im2col patch + f32 matmul result
    t = 2
    while t + 2 <= H and (t + 2) * W <= 2048 and step_bytes(t + 2) <= vmem_budget:
        t += 2
    if t >= H and H >= 4:                            # keep at least two row tiles
        half = H // 2
        t = max(2, half - (half % 2))
    return t


def conv_bn_relu_kernel(x_lo_ref, x_hi_ref, w_ref, b_ref, o_ref):
    # x_lo_ref: (1, tH, Wp, Cin)   bf16  padded rows [h*tH, h*tH+tH)
    # x_hi_ref: (1, 2,  Wp, Cin)   bf16  2-row halo below the tile
    # w_ref:    (9*Cin, Cout_p)    bf16  HWIO weights, BN scale folded, taps flattened
    # b_ref:    (1, Cout_p)        f32   folded BN bias (beta - mean * scale)
    # o_ref:    (1, tH, W, Cout_p) f32
    _, tH, W, Cout_p = o_ref.shape
    Cin = x_lo_ref.shape[3]

    # (tH + 2, Wp, Cin) padded rows needed by this output row tile.
    x = jnp.concatenate([x_lo_ref[0], x_hi_ref[0]], axis=0)

    # im2col: gather the 9 taps along the lane axis -> one deep-K MXU matmul.
    taps = []
    for ky in range(3):
        for kx in range(3):
            taps.append(x[ky:ky + tH, kx:kx + W, :].reshape(tH * W, Cin))
    patch = jnp.concatenate(taps, axis=-1)                        # (tH*W, 9*Cin) bf16

    acc = jnp.dot(patch, w_ref[...],
                  preferred_element_type=jnp.float32)             # (tH*W, Cout_p) f32
    out = jnp.maximum(acc + b_ref[...], 0.0)                      # BN bias + ReLU
    o_ref[0] = out.reshape(tH, W, Cout_p).astype(o_ref.dtype)


def conv_bn_relu(x_nchw, weight_oihw, gamma, beta, running_mean, running_var,
                 eps=1e-5):
    """Forward pass of Conv_bn_relu (kernel_size=3, stride=1, pad=1, ReLU, eval BN)."""
    N, Cin, H, W = x_nchw.shape
    Cout = weight_oihw.shape[0]
    Cout_p = _round_up(Cout, 128)           # lane-dense output stores

    # Fold BatchNorm (inference) into the conv: w' = w * scale, b' = beta - mean*scale.
    scale = gamma.astype(jnp.float32) / jnp.sqrt(running_var.astype(jnp.float32) + eps)
    bias = beta.astype(jnp.float32) - running_mean.astype(jnp.float32) * scale

    # OIHW -> HWIO, fold BN scale, flatten the 3x3 taps: (9*Cin, Cout_p), bf16.
    w_hwio = jnp.transpose(weight_oihw, (2, 3, 1, 0)).astype(jnp.float32)
    w_slab = (w_hwio * scale[None, None, None, :]).reshape(9 * Cin, Cout)
    w_slab = jnp.pad(w_slab.astype(jnp.bfloat16), ((0, 0), (0, Cout_p - Cout)))
    bias_p = jnp.pad(bias, (0, Cout_p - Cout)).reshape(1, Cout_p)

    vmem_cap = _vmem_capacity_bytes()
    tH = _pick_row_tile(H, W, Cin, Cout_p, vmem_budget=vmem_cap // 4)
    n_hblk = (H + tH - 1) // tH
    H_tiles = n_hblk * tH
    Hp = H_tiles + tH                        # 1 top zero row, >=1 bottom zero rows
    Wp = W + 2

    # NCHW -> NHWC (bf16 MXU inputs), zero-pad the spatial dims.
    x_nhwc = jnp.transpose(x_nchw, (0, 2, 3, 1)).astype(jnp.bfloat16)
    x_pad = jnp.pad(x_nhwc, ((0, 0), (1, Hp - H - 1), (1, 1), (0, 0)))

    halo_blk = tH // 2                       # x_hi uses 2-row blocks along padded H
    out_p = pl.pallas_call(
        conv_bn_relu_kernel,
        out_shape=jax.ShapeDtypeStruct((N, H_tiles, W, Cout_p), jnp.float32),
        grid_spec=pltpu.PrefetchScalarGridSpec(
            num_scalar_prefetch=0,
            grid=(N, n_hblk),
            in_specs=[
                pl.BlockSpec((1, tH, Wp, Cin), lambda n, h: (n, h, 0, 0)),
                pl.BlockSpec((1, 2, Wp, Cin),
                             lambda n, h: (n, (h + 1) * halo_blk, 0, 0)),
                # Weights / bias: constant index_map -> stay VMEM-resident.
                pl.BlockSpec((9 * Cin, Cout_p), lambda n, h: (0, 0)),
                pl.BlockSpec((1, Cout_p), lambda n, h: (0, 0)),
            ],
            out_specs=pl.BlockSpec((1, tH, W, Cout_p), lambda n, h: (n, h, 0, 0)),
        ),
        compiler_params=pltpu.CompilerParams(
            dimension_semantics=("parallel", "parallel"),
            vmem_limit_bytes=int(max(32 * 1024 * 1024, vmem_cap // 2)),
        ),
    )(x_pad, x_pad, w_slab, bias_p)

    # Drop row/channel padding, NHWC -> NCHW to match the PyTorch layout.
    out = out_p[:, :H, :, :Cout]
    return jnp.transpose(out, (0, 3, 1, 2))


def reference(x_nchw, weight_oihw, gamma, beta, running_mean, running_var,
              eps=1e-5):
    """PyTorch eval-mode Conv_bn_relu, mirroring the kernel's numerics policy
    (BN scale folded into bf16 weights, bf16 activations, f32 accumulation)."""
    scale = gamma / jnp.sqrt(running_var + eps)
    bias = beta - running_mean * scale
    w_fused = (weight_oihw * scale[:, None, None, None]).astype(jnp.bfloat16)
    xb = x_nchw.astype(jnp.bfloat16)
    conv = lax.conv_general_dilated(
        xb.astype(jnp.float32), w_fused.astype(jnp.float32),
        window_strides=(1, 1), padding=((1, 1), (1, 1)),
        dimension_numbers=("NCHW", "OIHW", "NCHW"),
        precision=lax.Precision.HIGHEST)
    return jnp.maximum(conv + bias.reshape(1, -1, 1, 1), 0.0)


if __name__ == "__main__":
    key = jax.random.PRNGKey(0)
    N, Cin, H, W = 2, 4, 16, 16
    Cout = 8

    k_x, k_w = jax.random.split(key)
    x = jax.random.normal(k_x, (N, Cin, H, W), dtype=jnp.float32)

    # Deterministic synthetic parameters (no checkpoint).
    fan_in = Cin * 3 * 3
    weight = (jax.random.normal(k_w, (Cout, Cin, 3, 3), dtype=jnp.float32)
              * (1.0 / np.sqrt(fan_in)))
    gamma = jnp.linspace(0.5, 1.5, Cout, dtype=jnp.float32)
    beta = jnp.linspace(-0.2, 0.2, Cout, dtype=jnp.float32)
    running_mean = jnp.linspace(-0.1, 0.1, Cout, dtype=jnp.float32)
    running_var = jnp.linspace(0.5, 2.0, Cout, dtype=jnp.float32)

    out = conv_bn_relu(x, weight, gamma, beta, running_mean, running_var)
    out = jax.block_until_ready(out)

    ref = reference(x, weight, gamma, beta, running_mean, running_var)
    np.testing.assert_allclose(np.asarray(out), np.asarray(ref),
                               rtol=2e-4, atol=2e-4)
    print("KERNEL_OK")
</pallas_src>

<mosaic_0001>
module attributes {stable_mosaic.version = 11 : i64} {
  func.func @conv_bn_relu_kernel(%arg0: i32, %arg1: i32, %arg2: memref<1x8x18x4xbf16, #tpu.memory_space<vmem>>, %arg3: memref<1x2x18x4xbf16, #tpu.memory_space<vmem>>, %arg4: memref<36x128xbf16, #tpu.memory_space<vmem>>, %arg5: memref<1x128xf32, #tpu.memory_space<vmem>>, %arg6: memref<1x8x16x128xf32, #tpu.memory_space<vmem>>) attributes {dimension_semantics = [#tpu.dimension_semantics<parallel>, #tpu.dimension_semantics<parallel>], iteration_bounds = array<i64: 2, 2>, scalar_prefetch = 0 : i64, scratch_operands = 0 : i64, tpu.core_type = #tpu.core_type<tc>, window_params = [{transform_indices = @transform_0, window_bounds = array<i64: 1, 8, 18, 4>}, {transform_indices = @transform_1, window_bounds = array<i64: 1, 2, 18, 4>}, {pipeline_mode = #tpu.pipeline_mode<synchronous>, transform_indices = @transform_2, window_bounds = array<i64: 36, 128>}, {pipeline_mode = #tpu.pipeline_mode<synchronous>, transform_indices = @transform_3, window_bounds = array<i64: 1, 128>}, {transform_indices = @transform_4, window_bounds = array<i64: 1, 8, 16, 128>}]} {
    %c0 = arith.constant 0 : index
    %c0_0 = arith.constant 0 : index
    %c0_1 = arith.constant 0 : index
    %c0_2 = arith.constant 0 : index
    %0 = vector.load %arg2[%c0, %c0_0, %c0_1, %c0_2] : memref<1x8x18x4xbf16, #tpu.memory_space<vmem>>, vector<1x8x18x4xbf16>
    %1 = vector.shape_cast %0 : vector<1x8x18x4xbf16> to vector<8x18x4xbf16>
    %c0_3 = arith.constant 0 : index
    %c0_4 = arith.constant 0 : index
    %c0_5 = arith.constant 0 : index
    %c0_6 = arith.constant 0 : index
    %2 = vector.load %arg3[%c0_3, %c0_4, %c0_5, %c0_6] : memref<1x2x18x4xbf16, #tpu.memory_space<vmem>>, vector<1x2x18x4xbf16>
    %3 = vector.shape_cast %2 : vector<1x2x18x4xbf16> to vector<2x18x4xbf16>
    %4 = tpu.concatenate %1, %3 in 0 : vector<8x18x4xbf16>, vector<2x18x4xbf16> -> vector<10x18x4xbf16>
    %5 = vector.extract_strided_slice %4 {offsets = [0, 0, 0], sizes = [8, 16, 4], strides = [1, 1, 1]} : vector<10x18x4xbf16> to vector<8x16x4xbf16>
    %6 = vector.shape_cast %5 : vector<8x16x4xbf16> to vector<128x4xbf16>
    %7 = vector.extract_strided_slice %4 {offsets = [0, 1, 0], sizes = [8, 16, 4], strides = [1, 1, 1]} : vector<10x18x4xbf16> to vector<8x16x4xbf16>
    %8 = vector.shape_cast %7 : vector<8x16x4xbf16> to vector<128x4xbf16>
    %9 = vector.extract_strided_slice %4 {offsets = [0, 2, 0], sizes = [8, 16, 4], strides = [1, 1, 1]} : vector<10x18x4xbf16> to vector<8x16x4xbf16>
    %10 = vector.shape_cast %9 : vector<8x16x4xbf16> to vector<128x4xbf16>
    %11 = vector.extract_strided_slice %4 {offsets = [1, 0, 0], sizes = [8, 16, 4], strides = [1, 1, 1]} : vector<10x18x4xbf16> to vector<8x16x4xbf16>
    %12 = vector.shape_cast %11 : vector<8x16x4xbf16> to vector<128x4xbf16>
    %13 = vector.extract_strided_slice %4 {offsets = [1, 1, 0], sizes = [8, 16, 4], strides = [1, 1, 1]} : vector<10x18x4xbf16> to vector<8x16x4xbf16>
    %14 = vector.shape_cast %13 : vector<8x16x4xbf16> to vector<128x4xbf16>
    %15 = vector.extract_strided_slice %4 {offsets = [1, 2, 0], sizes = [8, 16, 4], strides = [1, 1, 1]} : vector<10x18x4xbf16> to vector<8x16x4xbf16>
    %16 = vector.shape_cast %15 : vector<8x16x4xbf16> to vector<128x4xbf16>
    %17 = vector.extract_strided_slice %4 {offsets = [2, 0, 0], sizes = [8, 16, 4], strides = [1, 1, 1]} : vector<10x18x4xbf16> to vector<8x16x4xbf16>
    %18 = vector.shape_cast %17 : vector<8x16x4xbf16> to vector<128x4xbf16>
    %19 = vector.extract_strided_slice %4 {offsets = [2, 1, 0], sizes = [8, 16, 4], strides = [1, 1, 1]} : vector<10x18x4xbf16> to vector<8x16x4xbf16>
    %20 = vector.shape_cast %19 : vector<8x16x4xbf16> to vector<128x4xbf16>
    %21 = vector.extract_strided_slice %4 {offsets = [2, 2, 0], sizes = [8, 16, 4], strides = [1, 1, 1]} : vector<10x18x4xbf16> to vector<8x16x4xbf16>
    %22 = vector.shape_cast %21 : vector<8x16x4xbf16> to vector<128x4xbf16>
    %23 = tpu.concatenate %6, %8, %10, %12, %14, %16, %18, %20, %22 in 1 : vector<128x4xbf16>, vector<128x4xbf16>, vector<128x4xbf16>, vector<128x4xbf16>, vector<128x4xbf16>, vector<128x4xbf16>, vector<128x4xbf16>, vector<128x4xbf16>, vector<128x4xbf16> -> vector<128x36xbf16>
    %c0_7 = arith.constant 0 : index
    %c0_8 = arith.constant 0 : index
    %24 = vector.load %arg4[%c0_7, %c0_8] : memref<36x128xbf16, #tpu.memory_space<vmem>>, vector<36x128xbf16>
    %cst = arith.constant dense<0.000000e+00> : vector<128x128xf32>
    %25 = tpu.matmul %23, %24, %cst {dimension_numbers = #tpu.dot_dimension_numbers<[1], [0], [0], [1], [0, 0, 1, 1], [], []>} : vector<128x36xbf16>, vector<36x128xbf16>, vector<128x128xf32> -> vector<128x128xf32>
    %c0_9 = arith.constant 0 : index
    %c0_10 = arith.constant 0 : index
    %26 = vector.load %arg5[%c0_9, %c0_10] : memref<1x128xf32, #tpu.memory_space<vmem>>, vector<1x128xf32>
    %27 = vector.broadcast %26 : vector<1x128xf32> to vector<128x128xf32>
    %28 = arith.addf %25, %27 : vector<128x128xf32>
    %cst_11 = arith.constant 0.000000e+00 : f32
    %29 = vector.broadcast %cst_11 : f32 to vector<128x128xf32>
    %30 = arith.maximumf %28, %29 : vector<128x128xf32>
    %31 = vector.shape_cast %30 : vector<128x128xf32> to vector<8x16x128xf32>
    %c0_12 = arith.constant 0 : index
    %c0_13 = arith.constant 0 : index
    %c0_14 = arith.constant 0 : index
    %c0_15 = arith.constant 0 : index
    %32 = vector.load %arg6[%c0_12, %c0_13, %c0_14, %c0_15] : memref<1x8x16x128xf32, #tpu.memory_space<vmem>>, vector<1x8x16x128xf32>
    %33 = vector.shape_cast %32 : vector<1x8x16x128xf32> to vector<8x16x128xf32>
    %34 = vector.shape_cast %31 : vector<8x16x128xf32> to vector<1x8x16x128xf32>
    tpu.vector_store %arg6[%c0_12, %c0_13, %c0_14, %c0_15], %34 {strides = array<i32>} : memref<1x8x16x128xf32, #tpu.memory_space<vmem>>, vector<1x8x16x128xf32>,
    return
  }
  func.func @transform_0(%arg0: i32, %arg1: i32) -> (i32, i32, i32, i32) {
    %c0_i32 = arith.constant 0 : i32
    %c0_i32_0 = arith.constant 0 : i32
    %c0_i32_1 = arith.constant 0 : i32
    return %arg0, %arg1, %c0_i32, %c0_i32_0 : i32, i32, i32, i32
  }
  func.func @transform_1(%arg0: i32, %arg1: i32) -> (i32, i32, i32, i32) {
    %c1_i32 = arith.constant 1 : i32
    %0 = arith.addi %arg1, %c1_i32 : i32
    %c4_i32 = arith.constant 4 : i32
    %1 = arith.muli %0, %c4_i32 : i32
    %c0_i32 = arith.constant 0 : i32
    %c0_i32_0 = arith.constant 0 : i32
    %c0_i32_1 = arith.constant 0 : i32
    return %arg0, %1, %c0_i32, %c0_i32_0 : i32, i32, i32, i32
  }
  func.func @transform_2(%arg0: i32, %arg1: i32) -> (i32, i32) {
    %c0_i32 = arith.constant 0 : i32
    %c0_i32_0 = arith.constant 0 : i32
    %c0_i32_1 = arith.constant 0 : i32
    return %c0_i32, %c0_i32_0 : i32, i32
  }
  func.func @transform_3(%arg0: i32, %arg1: i32) -> (i32, i32) {
    %c0_i32 = arith.constant 0 : i32
    %c0_i32_0 = arith.constant 0 : i32
    %c0_i32_1 = arith.constant 0 : i32
    return %c0_i32, %c0_i32_0 : i32, i32
  }
  func.func @transform_4(%arg0: i32, %arg1: i32) -> (i32, i32, i32, i32) {
    %c0_i32 = arith.constant 0 : i32
    %c0_i32_0 = arith.constant 0 : i32
    %c0_i32_1 = arith.constant 0 : i32
    return %arg0, %arg1, %c0_i32, %c0_i32_0 : i32, i32, i32, i32
  }
}

</mosaic_0001>

<llo_original>
// kernel: tpu_custom_call.1
$region0: #{tpu_custom_call.1}
  #allocation0 [shape = 'u32[]', space=smem, size = 0x4, offset = 0x4, fixed_abs, tag = 'smem constant byte address 0x4 - core index']
  #allocation1 [shape = 'u32[72,128]{1,0:T(1,128)}', space=vmem, size = 0x9000, scoped, tag = 'internal scratch']
  %s0 = inlined_call_operand.vmem [shape: bf16[2,24,18,4], index: 0, kind: input, shape index: {}]
  %s1 = inlined_call_operand.vmem [shape: bf16[2,24,18,4], index: 1, kind: input, shape index: {}]
  %s2 = inlined_call_operand.vmem [shape: bf16[36,128], index: 2, kind: input, shape index: {}]
  %s3 = inlined_call_operand.vmem [shape: f32[1,128], index: 3, kind: input, shape index: {}]
  %s4 = inlined_call_operand.hbm [shape: f32[2,16,16,128], index: 4, kind: output, shape index: {}]
  %s5 = sld [smem:[#allocation0]]
  $region49: #{tpu_custom_call.1} parent=0
    _
  %s7 = ssub.s32 1, %s5
  %s8 = scalar_select 0, %s7, %s5
  $region1: #{tpu_custom_call.1} parent=0
    #allocation2 [shape = 'u8[131072]{0}', space=vmem, size = 0x20000, scoped, tag = 'output window, operand 0']
    #allocation3 [shape = 's32[2]{0}', space=sflag, size = 0x8, scoped, tag = 'scoped memory for tpu_custom_call.1']
    %9 = vsyncpa [#allocation3], 0
    %s10 = scalar_lea.sflag [#allocation3], 1
    %11 = vsyncpa %s10, 0
    loop: start=0, step=1, limit=6
    $region2: #{tpu_custom_call.1} parent=1 // loop_pre_header
      _
    $region3: #{tpu_custom_call.1} parent=1 // loop_header
      %s13 = sphi 0, %s17
      %p14 = scmp.ge.s32.totalorder %s13, 6
      %s20 = sphi 0, %s32
      %s21 = sphi 0, %s28
      %s22 = sphi 0, %s20
      %s23 = sphi 0, %s21
      %s24 = sphi 0, %s22
      %s25 = sphi 0, %s23
      %s37 = sphi 0, %s39
      %s40 = sphi 0, %s37
      %s41 = sphi 0, %s40
      %s57 = sphi 0, %s41
      %s69 = sphi 0, %s71
      %s72 = sphi 0, %s69
      %s73 = sphi 0, %s72
      %s89 = sphi 0, %s73
      %s93 = sphi 0, %s93
      %s95 = sphi 0, %s93
      %s96 = sphi 0, %s95
      %s110 = sphi 0, %s96
      %s114 = sphi 0, %s114
      %s116 = sphi 0, %s114
      %s117 = sphi 0, %s116
      %s131 = sphi 0, %s117
      %s139 = sphi 0, %s141
      %s142 = sphi 0, %s139
      %s143 = sphi 0, %s142
      %s159 = sphi 0, %s143
    $region4: #{tpu_custom_call.1} parent=1 // loop_header_branch
      %16 = sbr.rel (%p14) target = $region8
    $region5: #{tpu_custom_call.1} parent=1 // loop_body
      %s18 = ssub.s32 %s13, 1
      %s19 = ssub.s32 %s13, 2
      %s26 = sadd.s32 1, %s21
      %p27 = scmp.ge.s32.totalorder %s26, 2
      %s28 = scalar_select %p27, 0, %s26
      %s29 = sadd.s32 1, %s20
      %s30 = scalar_select %p27, %s29, %s20
      %p31 = scmp.ge.s32.totalorder %s30, 2
      %s32 = scalar_select %p31, 0, %s30
      %s33 = ssub.s32 %s20, %s32
      %s34 = ssub.s32 %s21, %s28
      %s35 = sor.u32 %s33, %s34
      %p36 = scmp.eq.s32.totalorder %s35, 0
      %s38 = sadd.s32 %s37, 1
      %s39 = scalar_select %p36, %s37, %s38
      %p42 = pneg %p36
      %p43 = scmp.eq.s32.totalorder %s13, 3
      %p44 = por %p42, %p43
      %p45 = scmp.ne.s32.totalorder %s37, %s40
      %p46 = scmp.eq.s32.totalorder %s13, 0
      %p47 = por %p45, %p46
      %p48 = scmp.ne.s32.totalorder %s37, %s40
      %p49 = scmp.eq.s32.totalorder %s18, 3
      %p50 = por %p48, %p49
      %p51 = scmp.ne.s32.totalorder %s40, %s41
      %p52 = scmp.eq.s32.totalorder %s18, 0
      %p53 = por %p51, %p52
      %p54 = scmp.ne.s32.totalorder %s40, %s41
      %p55 = scmp.eq.s32.totalorder %s19, 3
      %p56 = por %p54, %p55
      %p58 = scmp.ne.s32.totalorder %s41, %s57
      %p59 = scmp.eq.s32.totalorder %s19, 0
      %p60 = por %p58, %p59
      %s61 = sadd.s32 %s21, 1
      %s62 = smul.u32 %s61, 4
      %s63 = sadd.s32 %s28, 1
      %s64 = smul.u32 %s63, 4
      %s65 = ssub.s32 %s20, %s32
      %s66 = ssub.s32 %s62, %s64
      %s67 = sor.u32 %s65, %s66
      %p68 = scmp.eq.s32.totalorder %s67, 0
      %s70 = sadd.s32 %s69, 1
      %s71 = scalar_select %p68, %s69, %s70
      %p74 = pneg %p68
      %p75 = scmp.eq.s32.totalorder %s13, 3
      %p76 = por %p74, %p75
      %p77 = scmp.ne.s32.totalorder %s69, %s72
      %p78 = scmp.eq.s32.totalorder %s13, 0
      %p79 = por %p77, %p78
      %p80 = scmp.ne.s32.totalorder %s69, %s72
      %p81 = scmp.eq.s32.totalorder %s18, 3
      %p82 = por %p80, %p81
      %p83 = scmp.ne.s32.totalorder %s72, %s73
      %p84 = scmp.eq.s32.totalorder %s18, 0
      %p85 = por %p83, %p84
      %p86 = scmp.ne.s32.totalorder %s72, %s73
      %p87 = scmp.eq.s32.totalorder %s19, 3
      %p88 = por %p86, %p87
      %p90 = scmp.ne.s32.totalorder %s73, %s89
      %p91 = scmp.eq.s32.totalorder %s19, 0
      %p92 = por %p90, %p91
      %s94 = sadd.s32 %s93, 1
      %p97 = scmp.eq.s32.totalorder %s13, 3
      %p98 = scmp.ne.s32.totalorder %s93, %s95
      %p99 = scmp.eq.s32.totalorder %s13, 0
      %p100 = por %p98, %p99
      %p101 = scmp.ne.s32.totalorder %s93, %s95
      %p102 = scmp.eq.s32.totalorder %s18, 3
      %p103 = por %p101, %p102
      %p104 = scmp.ne.s32.totalorder %s95, %s96
      %p105 = scmp.eq.s32.totalorder %s18, 0
      %p106 = por %p104, %p105
      %p107 = scmp.ne.s32.totalorder %s95, %s96
      %p108 = scmp.eq.s32.totalorder %s19, 3
      %p109 = por %p107, %p108
      %p111 = scmp.ne.s32.totalorder %s96, %s110
      %p112 = scmp.eq.s32.totalorder %s19, 0
      %p113 = por %p111, %p112
      %s115 = sadd.s32 %s114, 1
      %p118 = scmp.eq.s32.totalorder %s13, 3
      %p119 = scmp.ne.s32.totalorder %s114, %s116
      %p120 = scmp.eq.s32.totalorder %s13, 0
      %p121 = por %p119, %p120
      %p122 = scmp.ne.s32.totalorder %s114, %s116
      %p123 = scmp.eq.s32.totalorder %s18, 3
      %p124 = por %p122, %p123
      %p125 = scmp.ne.s32.totalorder %s116, %s117
      %p126 = scmp.eq.s32.totalorder %s18, 0
      %p127 = por %p125, %p126
      %p128 = scmp.ne.s32.totalorder %s116, %s117
      %p129 = scmp.eq.s32.totalorder %s19, 3
      %p130 = por %p128, %p129
      %p132 = scmp.ne.s32.totalorder %s117, %s131
      %p133 = scmp.eq.s32.totalorder %s19, 0
      %p134 = por %p132, %p133
      %s135 = ssub.s32 %s20, %s32
      %s136 = ssub.s32 %s21, %s28
      %s137 = sor.u32 %s135, %s136
      %p138 = scmp.eq.s32.totalorder %s137, 0
      %s140 = sadd.s32 %s139, 1
      %s141 = scalar_select %p138, %s139, %s140
      %p144 = pneg %p138
      %p145 = scmp.eq.s32.totalorder %s13, 3
      %p146 = por %p144, %p145
      %p147 = scmp.ne.s32.totalorder %s139, %s142
      %p148 = scmp.eq.s32.totalorder %s13, 0
      %p149 = por %p147, %p148
      %p150 = scmp.ne.s32.totalorder %s139, %s142
      %p151 = scmp.eq.s32.totalorder %s18, 3
      %p152 = por %p150, %p151
      %p153 = scmp.ne.s32.totalorder %s142, %s143
      %p154 = scmp.eq.s32.totalorder %s18, 0
      %p155 = por %p153, %p154
      %p156 = scmp.ne.s32.totalorder %s142, %s143
      %p157 = scmp.eq.s32.totalorder %s19, 3
      %p158 = por %p156, %p157
      %p160 = scmp.ne.s32.totalorder %s143, %s159
      %p161 = scmp.eq.s32.totalorder %s19, 0
      %p162 = por %p160, %p161
      %p163 = scmp.le.s32.totalorder 1, %s13
      %p164 = scmp.lt.s32.totalorder %s13, 5
      %p165 = pnand %p163, %p164
      %p166 = pneg %p165
      // Predicated region
      $region9: #{tpu_custom_call.1} parent=5 // pred_check
        _
      $region10: #{tpu_custom_call.1} parent=5 // pred_check_branch
        %168 = sbr.rel (%p165) target = $region12
      $region11: #{tpu_custom_call.1} parent=5 // pred_region
        %s169 = ssub.s32 %s13, 1
        // Predicated region
        $region13: #{tpu_custom_call.1} parent=11 // pred_check
          %p170 = pneg %p106
        $region14: #{tpu_custom_call.1} parent=11 // pred_check_branch
          %172 = sbr.rel (%p170) target = $region16
        $region15: #{tpu_custom_call.1} parent=11 // pred_region
          _
        $region16: #{tpu_custom_call.1} parent=11 // pred_fallthru
          _
        // Predicated region
        $region17: #{tpu_custom_call.1} parent=11 // pred_check
          %p173 = pneg %p127
        $region18: #{tpu_custom_call.1} parent=11 // pred_check_branch
          %175 = sbr.rel (%p173) target = $region20
        $region19: #{tpu_custom_call.1} parent=11 // pred_region
          _
        $region20: #{tpu_custom_call.1} parent=11 // pred_fallthru
          _
      $region12: #{tpu_custom_call.1} parent=5 // pred_fallthru
        _
      %p176 = scmp.lt.s32.totalorder %s13, 4
      // Predicated region
      $region21: #{tpu_custom_call.1} parent=5 // pred_check
        %p177 = pneg %p176
      $region22: #{tpu_custom_call.1} parent=5 // pred_check_branch
        %179 = sbr.rel (%p177) target = $region24
      $region23: #{tpu_custom_call.1} parent=5 // pred_region
        // Predicated region
        $region25: #{tpu_custom_call.1} parent=23 // pred_check
          %p180 = pneg %p47
        $region26: #{tpu_custom_call.1} parent=23 // pred_check_branch
          %182 = sbr.rel (%p180) target = $region28
        $region27: #{tpu_custom_call.1} parent=23 // pred_region
          %s183 = smul.u32 8, %s21
          %p184 = scmp.lt.s32.totalorder %s20, 1
          %s185 = scalar_select %p184, %s20, 1
          %p186 = scmp.lt.s32.totalorder %s183, 23
          %s187 = scalar_select %p186, %s183, 23
          %s188 = smul.addr %s187, 3
          %s189 = smul.addr %s185, 72
          %s190 = sadd.s32 %s188, %s189
          %s191 = smul.addr %s190, 4
          %s192 = scalar_lea.vmem %s0, %s191
          %s193 = smul.u32 8, %s21
        $region28: #{tpu_custom_call.1} parent=23 // pred_fallthru
          _
        // Predicated region
        $region29: #{tpu_custom_call.1} parent=23 // pred_check
          %p194 = pneg %p79
        $region30: #{tpu_custom_call.1} parent=23 // pred_check_branch
          %196 = sbr.rel (%p194) target = $region32
        $region31: #{tpu_custom_call.1} parent=23 // pred_region
          %s197 = sadd.s32 %s21, 1
          %s198 = smul.u32 %s197, 4
          %s199 = smul.u32 2, %s198
          %p200 = scmp.lt.s32.totalorder %s20, 1
          %s201 = scalar_select %p200, %s20, 1
          %p202 = scmp.lt.s32.totalorder %s199, 23
          %s203 = scalar_select %p202, %s199, 23
          %s204 = smul.addr %s203, 3
          %s205 = smul.addr %s201, 72
          %s206 = sadd.s32 %s204, %s205
          %s207 = smul.addr %s206, 4
          %s208 = scalar_lea.vmem %s1, %s207
          %s209 = sadd.s32 %s21, 1
          %s210 = smul.u32 %s209, 4
          %s211 = smul.u32 2, %s210
        $region32: #{tpu_custom_call.1} parent=23 // pred_fallthru
          _
      $region24: #{tpu_custom_call.1} parent=5 // pred_fallthru
        _
      %p212 = scmp.le.s32.totalorder 1, %s13
      %p213 = scmp.lt.s32.totalorder %s13, 5
      %p214 = pnand %p212, %p213
      %p215 = pneg %p214
      // Predicated region
      $region33: #{tpu_custom_call.1} parent=5 // pred_check
        _
      $region34: #{tpu_custom_call.1} parent=5 // pred_check_branch
        %217 = sbr.rel (%p214) target = $region36
      $region35: #{tpu_custom_call.1} parent=5 // pred_region
        %s218 = ssub.s32 %s13, 1
        %s219 = smul.u32 8, %s23
        %p220 = scmp.lt.s32.totalorder %s22, 1
        %s221 = scalar_select %p220, %s22, 1
        %p222 = scmp.lt.s32.totalorder %s219, 23
        %s223 = scalar_select %p222, %s219, 23
        %s224 = smul.addr %s223, 3
        %s225 = smul.addr %s221, 72
        %s226 = sadd.s32 %s224, %s225
        %s227 = smul.addr %s226, 4
        %s228 = scalar_lea.vmem %s0, %s227
        %p229 = pneg %p53
        %p230 = pneg %p50
        %s231 = sadd.s32 %s23, 1
        %s232 = smul.u32 %s231, 4
        %s233 = smul.u32 2, %s232
        %p234 = scmp.lt.s32.totalorder %s22, 1
        %s235 = scalar_select %p234, %s22, 1
        %p236 = scmp.lt.s32.totalorder %s233, 23
        %s237 = scalar_select %p236, %s233, 23
        %s238 = smul.addr %s237, 3
        %s239 = smul.addr %s235, 72
        %s240 = sadd.s32 %s238, %s239
        %s241 = smul.addr %s240, 4
        %s242 = scalar_lea.vmem %s1, %s241
        %p243 = pneg %p85
        %p244 = pneg %p82
        %p245 = pneg %p106
        %p246 = pneg %p103
        %p247 = pneg %p127
        %p248 = pneg %p124
        %p249 = pneg %p155
        %p250 = pneg %p152
        %s251 = sand.u32 %s142, 1
        %s252 = scalar_lea.sflag [#allocation3], %s251
        %s253 = sand.u32 %s142, 1
        %s254 = smul.addr %s253, 128
        %s255 = scalar_lea.vmem [#allocation2], %s254
        %s256 = smul.u32 8, %s23
        %p257 = scmp.lt.s32.totalorder %s22, 1
        %s258 = scalar_select %p257, %s22, 1
        %p259 = scmp.lt.s32.totalorder %s256, 23
        %s260 = scalar_select %p259, %s256, 23
        %s261 = smul.addr %s260, 3
        %s262 = smul.addr %s258, 72
        %s263 = sadd.s32 %s261, %s262
        %s264 = smul.addr %s263, 4
        %s265 = scalar_lea.vmem %s0, %s264
        %s266 = smul.u32 8, %s23
        %s267 = sadd.s32 %s23, 1
        %s268 = smul.u32 %s267, 4
        %s269 = smul.u32 2, %s268
        %p270 = scmp.lt.s32.totalorder %s22, 1
        %s271 = scalar_select %p270, %s22, 1
        %p272 = scmp.lt.s32.totalorder %s269, 23
        %s273 = scalar_select %p272, %s269, 23
        %s274 = smul.addr %s273, 3
        %s275 = smul.addr %s271, 72
        %s276 = sadd.s32 %s274, %s275
        %s277 = smul.addr %s276, 4
        %s278 = scalar_lea.vmem %s1, %s277
        %s279 = sadd.s32 %s23, 1
        %s280 = smul.u32 %s279, 4
        %s281 = smul.u32 2, %s280
        %s282 = smul.u32 8, %s23
        %v284 = vld [vmem:[%s265] sm:$0xf]
        %v285 = vld [vmem:[%s265 + $0x4] sm:$0xf]
        %v286 = vld [vmem:[%s265 + $0x8] sm:$0x1]
        %v287 = vld [vmem:[%s265 + $0xc] sm:$0xf]
        %v288 = vld [vmem:[%s265 + $0x10] sm:$0xf]
        %v289 = vld [vmem:[%s265 + $0x14] sm:$0x1]
        %v290 = vld [vmem:[%s265 + $0x18] sm:$0xf]
        %v291 = vld [vmem:[%s265 + $0x1c] sm:$0xf]
        %v292 = vld [vmem:[%s265 + $0x20] sm:$0x1]
        %v293 = vld [vmem:[%s265 + $0x24] sm:$0xf]
        %v294 = vld [vmem:[%s265 + $0x28] sm:$0xf]
        %v295 = vld [vmem:[%s265 + $0x2c] sm:$0x1]
        %v296 = vld [vmem:[%s265 + $0x30] sm:$0xf]
        %v297 = vld [vmem:[%s265 + $0x34] sm:$0xf]
        %v298 = vld [vmem:[%s265 + $0x38] sm:$0x1]
        %v299 = vld [vmem:[%s265 + $0x3c] sm:$0xf]
        %v300 = vld [vmem:[%s265 + $0x40] sm:$0xf]
        %v301 = vld [vmem:[%s265 + $0x44] sm:$0x1]
        %v302 = vld [vmem:[%s265 + $0x48] sm:$0xf]
        %v303 = vld [vmem:[%s265 + $0x4c] sm:$0xf]
        %v304 = vld [vmem:[%s265 + $0x50] sm:$0x1]
        %v305 = vld [vmem:[%s265 + $0x54] sm:$0xf]
        %v306 = vld [vmem:[%s265 + $0x58] sm:$0xf]
        %v307 = vld [vmem:[%s265 + $0x5c] sm:$0x1]
        %v308 = vld [vmem:[%s278] sm:$0xf]
        %v309 = vld [vmem:[%s278 + $0x4] sm:$0xf]
        %v310 = vld [vmem:[%s278 + $0x8] sm:$0x1]
        %v311 = vld [vmem:[%s278 + $0xc] sm:$0xf]
        %v312 = vld [vmem:[%s278 + $0x10] sm:$0xf]
        %v313 = vld [vmem:[%s278 + $0x14] sm:$0x1]
        %vm314 = vsmask.f32 3328
        %vm315 = vsmask.f32 7440
        %vm316 = vmor %vm314, %vm315
        %v318 = vshrl.u32 %v284, 16
        %v320 = vrot.slane %v318, 4
        %v321 = vshll.u32 %v284, 16
        %v323 = vrot.slane %v321, 5
        %v324 = vor.u32 %v320, %v323
        %v325 = vrot.slane %v324, 4
        %v327 = vshll.u32 %v285, 16
        %v329 = vrot.slane %v327, 5
        %v330 = vsel %vm316, %v325, %v329
        %v331 = vshrl.u32 %v285, 16
        %v333 = vrot.slane %v331, 4
        %v334 = vor.u32 %v333, %v329
        %v335 = vrot.slane %v334, 4
        %v337 = vshll.u32 %v286, 16
        %v339 = vrot.slane %v337, 5
        %v340 = vsel %vm316, %v335, %v339
        %v342 = vshrl.u32 %v287, 16
        %v344 = vrot.slane %v342, 4
        %v345 = vshll.u32 %v287, 16
        %v347 = vrot.slane %v345, 5
        %v348 = vor.u32 %v344, %v347
        %v349 = vrot.slane %v348, 4
        %v351 = vshll.u32 %v288, 16
        %v353 = vrot.slane %v351, 5
        %v354 = vsel %vm316, %v349, %v353
        %v355 = vshrl.u32 %v288, 16
        %v357 = vrot.slane %v355, 4
        %v358 = vor.u32 %v357, %v353
        %v359 = vrot.slane %v358, 4
        %v361 = vshll.u32 %v289, 16
        %v363 = vrot.slane %v361, 5
        %v364 = vsel %vm316, %v359, %v363
        %v366 = vshrl.u32 %v290, 16
        %v368 = vrot.slane %v366, 4
        %v369 = vshll.u32 %v290, 16
        %v371 = vrot.slane %v369, 5
        %v372 = vor.u32 %v368, %v371
        %v373 = vrot.slane %v372, 4
        %v375 = vshll.u32 %v291, 16
        %v377 = vrot.slane %v375, 5
        %v378 = vsel %vm316, %v373, %v377
        %v379 = vshrl.u32 %v291, 16
        %v381 = vrot.slane %v379, 4
        %v382 = vor.u32 %v381, %v377
        %v383 = vrot.slane %v382, 4
        %v385 = vshll.u32 %v292, 16
        %v387 = vrot.slane %v385, 5
        %v388 = vsel %vm316, %v383, %v387
        %v390 = vshrl.u32 %v293, 16
        %v392 = vrot.slane %v390, 4
        %v393 = vshll.u32 %v293, 16
        %v395 = vrot.slane %v393, 5
        %v396 = vor.u32 %v392, %v395
        %v397 = vrot.slane %v396, 4
        %v399 = vshll.u32 %v294, 16
        %v401 = vrot.slane %v399, 5
        %v402 = vsel %vm316, %v397, %v401
        %v403 = vshrl.u32 %v294, 16
        %v405 = vrot.slane %v403, 4
        %v406 = vor.u32 %v405, %v401
        %v407 = vrot.slane %v406, 4
        %v409 = vshll.u32 %v295, 16
        %v411 = vrot.slane %v409, 5
        %v412 = vsel %vm316, %v407, %v411
        %v414 = vshrl.u32 %v296, 16
        %v416 = vrot.slane %v414, 4
        %v417 = vshll.u32 %v296, 16
        %v419 = vrot.slane %v417, 5
        %v420 = vor.u32 %v416, %v419
        %v421 = vrot.slane %v420, 4
        %v423 = vshll.u32 %v297, 16
        %v425 = vrot.slane %v423, 5
        %v426 = vsel %vm316, %v421, %v425
        %v427 = vshrl.u32 %v297, 16
        %v429 = vrot.slane %v427, 4
        %v430 = vor.u32 %v429, %v425
        %v431 = vrot.slane %v430, 4
        %v433 = vshll.u32 %v298, 16
        %v435 = vrot.slane %v433, 5
        %v436 = vsel %vm316, %v431, %v435
        %v438 = vshrl.u32 %v299, 16
        %v440 = vrot.slane %v438, 4
        %v441 = vshll.u32 %v299, 16
        %v443 = vrot.slane %v441, 5
        %v444 = vor.u32 %v440, %v443
        %v445 = vrot.slane %v444, 4
        %v447 = vshll.u32 %v300, 16
        %v449 = vrot.slane %v447, 5
        %v450 = vsel %vm316, %v445, %v449
        %v451 = vshrl.u32 %v300, 16
        %v453 = vrot.slane %v451, 4
        %v454 = vor.u32 %v453, %v449
        %v455 = vrot.slane %v454, 4
        %v457 = vshll.u32 %v301, 16
        %v459 = vrot.slane %v457, 5
        %v460 = vsel %vm316, %v455, %v459
        %v462 = vshrl.u32 %v302, 16
        %v464 = vrot.slane %v462, 4
        %v465 = vshll.u32 %v302, 16
        %v467 = vrot.slane %v465, 5
        %v468 = vor.u32 %v464, %v467
        %v469 = vrot.slane %v468, 4
        %v471 = vshll.u32 %v303, 16
        %v473 = vrot.slane %v471, 5
        %v474 = vsel %vm316, %v469, %v473
        %v475 = vshrl.u32 %v303, 16
        %v477 = vrot.slane %v475, 4
        %v478 = vor.u32 %v477, %v473
        %v479 = vrot.slane %v478, 4
        %v481 = vshll.u32 %v304, 16
        %v483 = vrot.slane %v481, 5
        %v484 = vsel %vm316, %v479, %v483
        %v486 = vshrl.u32 %v305, 16
        %v488 = vrot.slane %v486, 4
        %v489 = vshll.u32 %v305, 16
        %v491 = vrot.slane %v489, 5
        %v492 = vor.u32 %v488, %v491
        %v493 = vrot.slane %v492, 4
        %v495 = vshll.u32 %v306, 16
        %v497 = vrot.slane %v495, 5
        %v498 = vsel %vm316, %v493, %v497
        %v499 = vshrl.u32 %v306, 16
        %v501 = vrot.slane %v499, 4
        %v502 = vor.u32 %v501, %v497
        %v503 = vrot.slane %v502, 4
        %v505 = vshll.u32 %v307, 16
        %v507 = vrot.slane %v505, 5
        %v508 = vsel %vm316, %v503, %v507
        %vm533 = vcmask 1042432
        %vm534 = vcmask 1046532
        %vm535 = vmor %vm533, %vm534
        %v536 = vrot.slane %v284, 5
        %v537 = vrot.slane %v536, 4
        %v538 = vrot.slane %v285, 5
        %v539 = vsel %vm535, %v537, %v538
        %v540 = vrot.slane %v538, 4
        %v541 = vrot.slane %v286, 5
        %v542 = vsel %vm535, %v540, %v541
        %v543 = vrot.slane %v287, 5
        %v544 = vrot.slane %v543, 4
        %v545 = vrot.slane %v288, 5
        %v546 = vsel %vm535, %v544, %v545
        %v547 = vrot.slane %v545, 4
        %v548 = vrot.slane %v289, 5
        %v549 = vsel %vm535, %v547, %v548
        %v550 = vrot.slane %v290, 5
        %v551 = vrot.slane %v550, 4
        %v552 = vrot.slane %v291, 5
        %v553 = vsel %vm535, %v551, %v552
        %v554 = vrot.slane %v552, 4
        %v555 = vrot.slane %v292, 5
        %v556 = vsel %vm535, %v554, %v555
        %v557 = vrot.slane %v293, 5
        %v558 = vrot.slane %v557, 4
        %v559 = vrot.slane %v294, 5
        %v560 = vsel %vm535, %v558, %v559
        %v561 = vrot.slane %v559, 4
        %v562 = vrot.slane %v295, 5
        %v563 = vsel %vm535, %v561, %v562
        %v564 = vrot.slane %v296, 5
        %v565 = vrot.slane %v564, 4
        %v566 = vrot.slane %v297, 5
        %v567 = vsel %vm535, %v565, %v566
        %v568 = vrot.slane %v566, 4
        %v569 = vrot.slane %v298, 5
        %v570 = vsel %vm535, %v568, %v569
        %v571 = vrot.slane %v299, 5
        %v572 = vrot.slane %v571, 4
        %v573 = vrot.slane %v300, 5
        %v574 = vsel %vm535, %v572, %v573
        %v575 = vrot.slane %v573, 4
        %v576 = vrot.slane %v301, 5
        %v577 = vsel %vm535, %v575, %v576
        %v578 = vrot.slane %v302, 5
        %v579 = vrot.slane %v578, 4
        %v580 = vrot.slane %v303, 5
        %v581 = vsel %vm535, %v579, %v580
        %v582 = vrot.slane %v580, 4
        %v583 = vrot.slane %v304, 5
        %v584 = vsel %vm535, %v582, %v583
        %v585 = vrot.slane %v305, 5
        %v586 = vrot.slane %v585, 4
        %v587 = vrot.slane %v306, 5
        %v588 = vsel %vm535, %v586, %v587
        %v589 = vrot.slane %v587, 4
        %v590 = vrot.slane %v307, 5
        %v591 = vsel %vm535, %v589, %v590
        %v593 = vshrl.u32 %v308, 16
        %v595 = vrot.slane %v593, 4
        %v596 = vshll.u32 %v308, 16
        %v598 = vrot.slane %v596, 5
        %v599 = vor.u32 %v595, %v598
        %v600 = vrot.slane %v599, 4
        %v602 = vshll.u32 %v309, 16
        %v604 = vrot.slane %v602, 5
        %v605 = vsel %vm316, %v600, %v604
        %v606 = vshrl.u32 %v309, 16
        %v608 = vrot.slane %v606, 4
        %v609 = vor.u32 %v608, %v604
        %v610 = vrot.slane %v609, 4
        %v612 = vshll.u32 %v310, 16
        %v614 = vrot.slane %v612, 5
        %v615 = vsel %vm316, %v610, %v614
        %v619 = vrot.slane %v308, 5
        %v620 = vrot.slane %v619, 4
        %v621 = vrot.slane %v309, 5
        %v622 = vsel %vm535, %v620, %v621
        %v623 = vrot.slane %v621, 4
        %v624 = vrot.slane %v310, 5
        %v625 = vsel %vm535, %v623, %v624
        %v627 = vshrl.u32 %v311, 16
        %v629 = vrot.slane %v627, 4
        %v630 = vshll.u32 %v311, 16
        %v632 = vrot.slane %v630, 5
        %v633 = vor.u32 %v629, %v632
        %v634 = vrot.slane %v633, 4
        %v636 = vshll.u32 %v312, 16
        %v638 = vrot.slane %v636, 5
        %v639 = vsel %vm316, %v634, %v638
        %v640 = vshrl.u32 %v312, 16
        %v642 = vrot.slane %v640, 4
        %v643 = vor.u32 %v642, %v638
        %v644 = vrot.slane %v643, 4
        %v646 = vshll.u32 %v313, 16
        %v648 = vrot.slane %v646, 5
        %v649 = vsel %vm316, %v644, %v648
        %v653 = vrot.slane %v311, 5
        %v654 = vrot.slane %v653, 4
        %v655 = vrot.slane %v312, 5
        %v656 = vsel %vm535, %v654, %v655
        %v657 = vrot.slane %v655, 4
        %v658 = vrot.slane %v313, 5
        %v659 = vsel %vm535, %v657, %v658
        %v660 = vunpack.c.l.b16 %v284
        %v661 = vunpack.c.l.b16 %v285
        %v662 = vunpack.c.l.b16 %v287
        %v663 = vunpack.c.l.b16 %v288
        %v664 = vunpack.c.l.b16 %v290
        %v665 = vunpack.c.l.b16 %v291
        %v666 = vunpack.c.l.b16 %v293
        %v667 = vunpack.c.l.b16 %v294
        %v668 = vunpack.c.l.b16 %v296
        %v669 = vunpack.c.l.b16 %v297
        %v670 = vunpack.c.l.b16 %v299
        %v671 = vunpack.c.l.b16 %v300
        %v672 = vunpack.c.l.b16 %v302
        %v673 = vunpack.c.l.b16 %v303
        %v674 = vunpack.c.l.b16 %v305
        %v675 = vunpack.c.l.b16 %v306
        %v676 = vpack.c.b16 %v661, %v660
        %v677 = vpack.c.b16 %v663, %v662
        %v678 = vpack.c.b16 %v665, %v664
        %v679 = vpack.c.b16 %v667, %v666
        %v680 = vpack.c.b16 %v669, %v668
        %v681 = vpack.c.b16 %v671, %v670
        %v682 = vpack.c.b16 %v673, %v672
        %v683 = vpack.c.b16 %v675, %v674
        %v684 = vunpack.c.l.b16 %v330
        %v685 = vunpack.c.l.b16 %v340
        %v686 = vunpack.c.l.b16 %v354
        %v687 = vunpack.c.l.b16 %v364
        %v688 = vunpack.c.l.b16 %v378
        %v689 = vunpack.c.l.b16 %v388
        %v690 = vunpack.c.l.b16 %v402
        %v691 = vunpack.c.l.b16 %v412
        %v692 = vunpack.c.l.b16 %v426
        %v693 = vunpack.c.l.b16 %v436
        %v694 = vunpack.c.l.b16 %v450
        %v695 = vunpack.c.l.b16 %v460
        %v696 = vunpack.c.l.b16 %v474
        %v697 = vunpack.c.l.b16 %v484
        %v698 = vunpack.c.l.b16 %v498
        %v699 = vunpack.c.l.b16 %v508
        %v700 = vpack.c.b16 %v685, %v684
        %v701 = vpack.c.b16 %v687, %v686
        %v702 = vpack.c.b16 %v689, %v688
        %v703 = vpack.c.b16 %v691, %v690
        %v704 = vpack.c.b16 %v693, %v692
        %v705 = vpack.c.b16 %v695, %v694
        %v706 = vpack.c.b16 %v697, %v696
        %v707 = vpack.c.b16 %v699, %v698
        %708 = vrot.lane.b32.xlu0 %v700, 4
        %v709 = vpop.permute.xlu0 %708
        %710 = vrot.lane.b32.xlu0 %v701, 4
        %v711 = vpop.permute.xlu0 %710
        %712 = vrot.lane.b32.xlu0 %v702, 4
        %v713 = vpop.permute.xlu0 %712
        %714 = vrot.lane.b32.xlu0 %v703, 4
        %v715 = vpop.permute.xlu0 %714
        %716 = vrot.lane.b32.xlu0 %v704, 4
        %v717 = vpop.permute.xlu0 %716
        %718 = vrot.lane.b32.xlu0 %v705, 4
        %v719 = vpop.permute.xlu0 %718
        %720 = vrot.lane.b32.xlu0 %v706, 4
        %v721 = vpop.permute.xlu0 %720
        %722 = vrot.lane.b32.xlu0 %v707, 4
        %v723 = vpop.permute.xlu0 %722
        %v724 = vunpack.c.l.b16 %v539
        %v725 = vunpack.c.l.b16 %v542
        %v726 = vunpack.c.l.b16 %v546
        %v727 = vunpack.c.l.b16 %v549
        %v728 = vunpack.c.l.b16 %v553
        %v729 = vunpack.c.l.b16 %v556
        %v730 = vunpack.c.l.b16 %v560
        %v731 = vunpack.c.l.b16 %v563
        %v732 = vunpack.c.l.b16 %v567
        %v733 = vunpack.c.l.b16 %v570
        %v734 = vunpack.c.l.b16 %v574
        %v735 = vunpack.c.l.b16 %v577
        %v736 = vunpack.c.l.b16 %v581
        %v737 = vunpack.c.l.b16 %v584
        %v738 = vunpack.c.l.b16 %v588
        %v739 = vunpack.c.l.b16 %v591
        %v740 = vpack.c.b16 %v725, %v724
        %v741 = vpack.c.b16 %v727, %v726
        %v742 = vpack.c.b16 %v729, %v728
        %v743 = vpack.c.b16 %v731, %v730
        %v744 = vpack.c.b16 %v733, %v732
        %v745 = vpack.c.b16 %v735, %v734
        %v746 = vpack.c.b16 %v737, %v736
        %v747 = vpack.c.b16 %v739, %v738
        %748 = vrot.lane.b32.xlu0 %v740, 8
        %v749 = vpop.permute.xlu0 %748
        %750 = vrot.lane.b32.xlu0 %v741, 8
        %v751 = vpop.permute.xlu0 %750
        %752 = vrot.lane.b32.xlu0 %v742, 8
        %v753 = vpop.permute.xlu0 %752
        %754 = vrot.lane.b32.xlu0 %v743, 8
        %v755 = vpop.permute.xlu0 %754
        %756 = vrot.lane.b32.xlu0 %v744, 8
        %v757 = vpop.permute.xlu0 %756
        %758 = vrot.lane.b32.xlu0 %v745, 8
        %v759 = vpop.permute.xlu0 %758
        %760 = vrot.lane.b32.xlu0 %v746, 8
        %v761 = vpop.permute.xlu0 %760
        %762 = vrot.lane.b32.xlu0 %v747, 8
        %v763 = vpop.permute.xlu0 %762
        %v764 = vunpack.c.l.b16 %v308
        %v765 = vunpack.c.l.b16 %v309
        %v766 = vpack.c.b16 %v765, %v764
        %767 = vrot.lane.b32.xlu0 %v677, 12
        %v768 = vpop.permute.xlu0 %767
        %769 = vrot.lane.b32.xlu0 %v678, 12
        %v770 = vpop.permute.xlu0 %769
        %771 = vrot.lane.b32.xlu0 %v679, 12
        %v772 = vpop.permute.xlu0 %771
        %773 = vrot.lane.b32.xlu0 %v680, 12
        %v774 = vpop.permute.xlu0 %773
        %775 = vrot.lane.b32.xlu0 %v681, 12
        %v776 = vpop.permute.xlu0 %775
        %777 = vrot.lane.b32.xlu0 %v682, 12
        %v778 = vpop.permute.xlu0 %777
        %779 = vrot.lane.b32.xlu0 %v683, 12
        %v780 = vpop.permute.xlu0 %779
        %781 = vrot.lane.b32.xlu0 %v766, 12
        %v782 = vpop.permute.xlu0 %781
        %v783 = vunpack.c.l.b16 %v605
        %v784 = vunpack.c.l.b16 %v615
        %v785 = vpack.c.b16 %v784, %v783
        %786 = vrot.lane.b32.xlu0 %v701, 16
        %v787 = vpop.permute.xlu0 %786
        %788 = vrot.lane.b32.xlu0 %v702, 16
        %v789 = vpop.permute.xlu0 %788
        %790 = vrot.lane.b32.xlu0 %v703, 16
        %v791 = vpop.permute.xlu0 %790
        %792 = vrot.lane.b32.xlu0 %v704, 16
        %v793 = vpop.permute.xlu0 %792
        %794 = vrot.lane.b32.xlu0 %v705, 16
        %v795 = vpop.permute.xlu0 %794
        %796 = vrot.lane.b32.xlu0 %v706, 16
        %v797 = vpop.permute.xlu0 %796
        %798 = vrot.lane.b32.xlu0 %v707, 16
        %v799 = vpop.permute.xlu0 %798
        %800 = vrot.lane.b32.xlu0 %v785, 16
        %v801 = vpop.permute.xlu0 %800
        %v802 = vunpack.c.l.b16 %v622
        %v803 = vunpack.c.l.b16 %v625
        %v804 = vpack.c.b16 %v803, %v802
        %805 = vrot.lane.b32.xlu0 %v741, 20
        %v806 = vpop.permute.xlu0 %805
        %807 = vrot.lane.b32.xlu0 %v742, 20
        %v808 = vpop.permute.xlu0 %807
        %809 = vrot.lane.b32.xlu0 %v743, 20
        %v810 = vpop.permute.xlu0 %809
        %811 = vrot.lane.b32.xlu0 %v744, 20
        %v812 = vpop.permute.xlu0 %811
        %813 = vrot.lane.b32.xlu0 %v745, 20
        %v814 = vpop.permute.xlu0 %813
        %815 = vrot.lane.b32.xlu0 %v746, 20
        %v816 = vpop.permute.xlu0 %815
        %817 = vrot.lane.b32.xlu0 %v747, 20
        %v818 = vpop.permute.xlu0 %817
        %819 = vrot.lane.b32.xlu0 %v804, 20
        %v820 = vpop.permute.xlu0 %819
        %v821 = vunpack.c.l.b16 %v311
        %v822 = vunpack.c.l.b16 %v312
        %v823 = vpack.c.b16 %v822, %v821
        %824 = vrot.lane.b32.xlu0 %v678, 24
        %v825 = vpop.permute.xlu0 %824
        %826 = vrot.lane.b32.xlu0 %v679, 24
        %v827 = vpop.permute.xlu0 %826
        %828 = vrot.lane.b32.xlu0 %v680, 24
        %v829 = vpop.permute.xlu0 %828
        %830 = vrot.lane.b32.xlu0 %v681, 24
        %v831 = vpop.permute.xlu0 %830
        %832 = vrot.lane.b32.xlu0 %v682, 24
        %v833 = vpop.permute.xlu0 %832
        %834 = vrot.lane.b32.xlu0 %v683, 24
        %v835 = vpop.permute.xlu0 %834
        %836 = vrot.lane.b32.xlu0 %v766, 24
        %v837 = vpop.permute.xlu0 %836
        %838 = vrot.lane.b32.xlu0 %v823, 24
        %v839 = vpop.permute.xlu0 %838
        %v840 = vunpack.c.l.b16 %v639
        %v841 = vunpack.c.l.b16 %v649
        %v842 = vpack.c.b16 %v841, %v840
        %843 = vrot.lane.b32.xlu0 %v702, 28
        %v844 = vpop.permute.xlu0 %843
        %845 = vrot.lane.b32.xlu0 %v703, 28
        %v846 = vpop.permute.xlu0 %845
        %847 = vrot.lane.b32.xlu0 %v704, 28
        %v848 = vpop.permute.xlu0 %847
        %849 = vrot.lane.b32.xlu0 %v705, 28
        %v850 = vpop.permute.xlu0 %849
        %851 = vrot.lane.b32.xlu0 %v706, 28
        %v852 = vpop.permute.xlu0 %851
        %853 = vrot.lane.b32.xlu0 %v707, 28
        %v854 = vpop.permute.xlu0 %853
        %855 = vrot.lane.b32.xlu0 %v785, 28
        %v856 = vpop.permute.xlu0 %855
        %857 = vrot.lane.b32.xlu0 %v842, 28
        %v858 = vpop.permute.xlu0 %857
        %v859 = vunpack.c.l.b16 %v656
        %v860 = vunpack.c.l.b16 %v659
        %v861 = vpack.c.b16 %v860, %v859
        %862 = vrot.lane.b32.xlu0 %v742, 32
        %v863 = vpop.permute.xlu0 %862
        %864 = vrot.lane.b32.xlu0 %v743, 32
        %v865 = vpop.permute.xlu0 %864
        %866 = vrot.lane.b32.xlu0 %v744, 32
        %v867 = vpop.permute.xlu0 %866
        %868 = vrot.lane.b32.xlu0 %v745, 32
        %v869 = vpop.permute.xlu0 %868
        %870 = vrot.lane.b32.xlu0 %v746, 32
        %v871 = vpop.permute.xlu0 %870
        %872 = vrot.lane.b32.xlu0 %v747, 32
        %v873 = vpop.permute.xlu0 %872
        %874 = vrot.lane.b32.xlu0 %v804, 32
        %v875 = vpop.permute.xlu0 %874
        %876 = vrot.lane.b32.xlu0 %v861, 32
        %v877 = vpop.permute.xlu0 %876
        %vm878 = vcmask 31744
        %v881 = vsel %vm878, %v676, %v709
        %v884 = vsel %vm878, %v677, %v711
        %v887 = vsel %vm878, %v678, %v713
        %v890 = vsel %vm878, %v679, %v715
        %v893 = vsel %vm878, %v680, %v717
        %v896 = vsel %vm878, %v681, %v719
        %v899 = vsel %vm878, %v682, %v721
        %v902 = vsel %vm878, %v683, %v723
        %vm903 = vcmask 64512
        %v905 = vsel %vm903, %v881, %v749
        %v907 = vsel %vm903, %v884, %v751
        %v909 = vsel %vm903, %v887, %v753
        %v911 = vsel %vm903, %v890, %v755
        %v913 = vsel %vm903, %v893, %v757
        %v915 = vsel %vm903, %v896, %v759
        %v917 = vsel %vm903, %v899, %v761
        %v919 = vsel %vm903, %v902, %v763
        %vm920 = vcmask 97280
        %v922 = vsel %vm920, %v905, %v768
        %v924 = vsel %vm920, %v907, %v770
        %v926 = vsel %vm920, %v909, %v772
        %v928 = vsel %vm920, %v911, %v774
        %v930 = vsel %vm920, %v913, %v776
        %v932 = vsel %vm920, %v915, %v778
        %v934 = vsel %vm920, %v917, %v780
        %v936 = vsel %vm920, %v919, %v782
        %vm937 = vcmask 130048
        %v939 = vsel %vm937, %v922, %v787
        %v941 = vsel %vm937, %v924, %v789
        %v943 = vsel %vm937, %v926, %v791
        %v945 = vsel %vm937, %v928, %v793
        %v947 = vsel %vm937, %v930, %v795
        %v949 = vsel %vm937, %v932, %v797
        %v951 = vsel %vm937, %v934, %v799
        %v953 = vsel %vm937, %v936, %v801
        %vm954 = vcmask 162816
        %v956 = vsel %vm954, %v939, %v806
        %v958 = vsel %vm954, %v941, %v808
        %v960 = vsel %vm954, %v943, %v810
        %v962 = vsel %vm954, %v945, %v812
        %v964 = vsel %vm954, %v947, %v814
        %v966 = vsel %vm954, %v949, %v816
        %v968 = vsel %vm954, %v951, %v818
        %v970 = vsel %vm954, %v953, %v820
        %vm971 = vcmask 195584
        %v973 = vsel %vm971, %v956, %v825
        %v975 = vsel %vm971, %v958, %v827
        %v977 = vsel %vm971, %v960, %v829
        %v979 = vsel %vm971, %v962, %v831
        %v981 = vsel %vm971, %v964, %v833
        %v983 = vsel %vm971, %v966, %v835
        %v985 = vsel %vm971, %v968, %v837
        %v987 = vsel %vm971, %v970, %v839
        %vm988 = vcmask 228352
        %v990 = vsel %vm988, %v973, %v844
        %v992 = vsel %vm988, %v975, %v846
        %v994 = vsel %vm988, %v977, %v848
        %v996 = vsel %vm988, %v979, %v850
        %v998 = vsel %vm988, %v981, %v852
        %v1000 = vsel %vm988, %v983, %v854
        %v1002 = vsel %vm988, %v985, %v856
        %v1004 = vsel %vm988, %v987, %v858
        %vm1005 = vcmask 261120
        %v1007 = vsel %vm1005, %v990, %v863
        %v1009 = vsel %vm1005, %v992, %v865
        %v1011 = vsel %vm1005, %v994, %v867
        %v1013 = vsel %vm1005, %v996, %v869
        %v1015 = vsel %vm1005, %v998, %v871
        %v1017 = vsel %vm1005, %v1000, %v873
        %v1019 = vsel %vm1005, %v1002, %v875
        %v1021 = vsel %vm1005, %v1004, %v877
        %v1022 = vld [vmem:[%s2] sm:$0xf]
        %v1023 = vld [vmem:[%s2 + $0x4] sm:$0xf]
        %v1024 = vld [vmem:[%s2 + $0x8] sm:$0xf]
        %v1025 = vld [vmem:[%s2 + $0xc] sm:$0xf]
        %v1026 = vld [vmem:[%s2 + $0x10] sm:$0x3]
        %v1027 = vld [vmem:[%s3] sm:$0x1]
        %v1029 = vperm.slane %v1027, 0
        %v1036 = vunpack.c.l.b16 %v1022
        %v1037 = vunpack.c.l.b16 %v1023
        %v1038 = vunpack.c.l.b16 %v1024
        %v1039 = vunpack.c.l.b16 %v1025
        %v1040 = vunpack.c.l.b16 %v1026
        %v1041 = vpack.c.b16 %v1037, %v1036
        %v1042 = vpack.c.b16 %v1039, %v1038
        %v1043 = vpack.c.b16 %v1040, %v1040
        %vm1046 = vcmask 293888
        %v1047 = vsel %vm1046, %v1007, 0
        %v1049 = vsel %vm1046, %v1009, 0
        %v1051 = vsel %vm1046, %v1011, 0
        %v1053 = vsel %vm1046, %v1013, 0
        %v1055 = vsel %vm1046, %v1015, 0
        %v1057 = vsel %vm1046, %v1017, 0
        %v1059 = vsel %vm1046, %v1019, 0
        %v1061 = vsel %vm1046, %v1021, 0
        %vm1063 = vcmask 1041408
        %v1065 = vsel %vm1063, %v1043, 0
        %1067 = vmatpush.bf16.msra.mxu0 0
        %1068 = vmatpush.bf16.msra.mxu0 0
        %1069 = vmatpush.bf16.msra.mxu0 0
        %1070 = vmatpush.bf16.msra.mxu0 0
        %1071 = vmatpush.bf16.msra.mxu0 0
        %1072 = vmatpush.bf16.msra.mxu0 %v1065
        %1073 = vmatpush.bf16.msra.mxu0 %v1042
        %1074 = vmatpush.bf16.msra.mxu0 %v1041
        %1075 = vmatmul.bf16.gmra.mxu0 %v1047
        %v1076 = vpop.f32.mrf.mxu0
        %v1077 = vadd.f32 %v1029, %v1076
        %v1078 = vpop.f32.mrf.mxu0
        %v1079 = vadd.f32 %v1029, %v1078
        %1080 = vmatmul.bf16.gmra.mxu0 %v1049
        %v1081 = vpop.f32.mrf.mxu0
        %v1082 = vadd.f32 %v1029, %v1081
        %v1083 = vpop.f32.mrf.mxu0
        %v1084 = vadd.f32 %v1029, %v1083
        %1085 = vmatmul.bf16.gmra.mxu0 %v1051
        %v1086 = vpop.f32.mrf.mxu0
        %v1087 = vadd.f32 %v1029, %v1086
        %v1088 = vpop.f32.mrf.mxu0
        %v1089 = vadd.f32 %v1029, %v1088
        %1090 = vmatmul.bf16.gmra.mxu0 %v1053
        %v1091 = vpop.f32.mrf.mxu0
        %v1092 = vadd.f32 %v1029, %v1091
        %v1093 = vpop.f32.mrf.mxu0
        %v1094 = vadd.f32 %v1029, %v1093
        %1095 = vmatmul.bf16.gmra.mxu0 %v1055
        %v1096 = vpop.f32.mrf.mxu0
        %v1097 = vadd.f32 %v1029, %v1096
        %v1098 = vpop.f32.mrf.mxu0
        %v1099 = vadd.f32 %v1029, %v1098
        %1100 = vmatmul.bf16.gmra.mxu0 %v1057
        %v1101 = vpop.f32.mrf.mxu0
        %v1102 = vadd.f32 %v1029, %v1101
        %v1103 = vpop.f32.mrf.mxu0
        %v1104 = vadd.f32 %v1029, %v1103
        %1105 = vmatmul.bf16.gmra.mxu0 %v1059
        %v1106 = vpop.f32.mrf.mxu0
        %v1107 = vadd.f32 %v1029, %v1106
        %v1108 = vpop.f32.mrf.mxu0
        %v1109 = vadd.f32 %v1029, %v1108
        %1110 = vmatmul.bf16.gmra.mxu0 %v1061
        %v1111 = vpop.f32.mrf.mxu0
        %v1112 = vadd.f32 %v1029, %v1111
        %v1113 = vpop.f32.mrf.mxu0
        %v1114 = vadd.f32 %v1029, %v1113
        %1115 = vdwg.mxu0
        %v1116 = vmax.f32 %v1077, 0.0
        %v1117 = vmax.f32 %v1079, 0.0
        %v1118 = vmax.f32 %v1082, 0.0
        %v1119 = vmax.f32 %v1084, 0.0
        %v1120 = vmax.f32 %v1087, 0.0
        %v1121 = vmax.f32 %v1089, 0.0
        %v1122 = vmax.f32 %v1092, 0.0
        %v1123 = vmax.f32 %v1094, 0.0
        %v1124 = vmax.f32 %v1097, 0.0
        %v1125 = vmax.f32 %v1099, 0.0
        %v1126 = vmax.f32 %v1102, 0.0
        %v1127 = vmax.f32 %v1104, 0.0
        %v1128 = vmax.f32 %v1107, 0.0
        %v1129 = vmax.f32 %v1109, 0.0
        %v1130 = vmax.f32 %v1112, 0.0
        %v1131 = vmax.f32 %v1114, 0.0
        %1132 = vst [vmem:[%s255] sm:$0xff] %v1116
        %1133 = vst [vmem:[%s255 + $0x8] sm:$0xff] %v1117
        %1134 = vst [vmem:[%s255 + $0x10] sm:$0xff] %v1118
        %1135 = vst [vmem:[%s255 + $0x18] sm:$0xff] %v1119
        %1136 = vst [vmem:[%s255 + $0x20] sm:$0xff] %v1120
        %1137 = vst [vmem:[%s255 + $0x28] sm:$0xff] %v1121
        %1138 = vst [vmem:[%s255 + $0x30] sm:$0xff] %v1122
        %1139 = vst [vmem:[%s255 + $0x38] sm:$0xff] %v1123
        %1140 = vst [vmem:[%s255 + $0x40] sm:$0xff] %v1124
        %1141 = vst [vmem:[%s255 + $0x48] sm:$0xff] %v1125
        %1142 = vst [vmem:[%s255 + $0x50] sm:$0xff] %v1126
        %1143 = vst [vmem:[%s255 + $0x58] sm:$0xff] %v1127
        %1144 = vst [vmem:[%s255 + $0x60] sm:$0xff] %v1128
        %1145 = vst [vmem:[%s255 + $0x68] sm:$0xff] %v1129
        %1146 = vst [vmem:[%s255 + $0x70] sm:$0xff] %v1130
        %1147 = vst [vmem:[%s255 + $0x78] sm:$0xff] %v1131
        %s1148 = sand.u32 %s142, 1
        %s1149 = scalar_lea.sflag [#allocation3], %s1148
        %s1150 = sand.u32 %s142, 1
        %s1151 = smul.addr %s1150, 128
        %s1152 = scalar_lea.vmem [#allocation2], %s1151
        // Predicated region
        $region37: #{tpu_custom_call.1} parent=35 // pred_check
          %p1153 = pneg %p152
        $region38: #{tpu_custom_call.1} parent=35 // pred_check_branch
          %1155 = sbr.rel (%p1153) target = $region40
        $region39: #{tpu_custom_call.1} parent=35 // pred_region
          %s1156 = smul.u32 8, %s23
          %1158 = vsyncadd %s1149, 0
          %s1159 = smul.addr %s1156, 2
          %s1160 = smul.addr %s22, 32
          %s1161 = sadd.s32 %s1159, %s1160
          %s1162 = smul.addr %s1161, 8
          %s1163 = scalar_lea.hbm %s4, %s1162
          %s1164 = sshll.u32 %s1152, 4
          %s1165 = int_to_ptr.vmem [resolvable:$true] %s1164
          %s1166 = sshll.u32 %s1163, 4
          %s1167 = int_to_ptr.hbm [resolvable:$true] %s1166
          %1172 = dma.vmem_to_hbm [thread:$0]  %s1165, 2048, %s1167, %s1149, 128, 128, 8
        $region40: #{tpu_custom_call.1} parent=35 // pred_fallthru
          _
      $region36: #{tpu_custom_call.1} parent=5 // pred_fallthru
        _
      %p1173 = scmp.le.s32.totalorder 2, %s13
      // Predicated region
      $region41: #{tpu_custom_call.1} parent=5 // pred_check
        %p1174 = pneg %p1173
      $region42: #{tpu_custom_call.1} parent=5 // pred_check_branch
        %1176 = sbr.rel (%p1174) target = $region44
      $region43: #{tpu_custom_call.1} parent=5 // pred_region
        %s1177 = ssub.s32 %s13, 2
        // Predicated region
        $region45: #{tpu_custom_call.1} parent=43 // pred_check
          %p1178 = pneg %p158
        $region46: #{tpu_custom_call.1} parent=43 // pred_check_branch
          %1180 = sbr.rel (%p1178) target = $region48
        $region47: #{tpu_custom_call.1} parent=43 // pred_region
          %s1181 = sand.u32 %s143, 1
          %s1182 = scalar_lea.sflag [#allocation3], %s1181
          %s1183 = sand.u32 %s143, 1
          %s1184 = smul.addr %s1183, 128
          %s1185 = scalar_lea.vmem [#allocation2], %s1184
          %1187 = dma.done %s1182, 2048
        $region48: #{tpu_custom_call.1} parent=43 // pred_fallthru
          _
      $region44: #{tpu_custom_call.1} parent=5 // pred_fallthru
        _
    $region6: #{tpu_custom_call.1} parent=1 // loop_footer
      %s17 = sadd.s32 1, %s13
    $region7: #{tpu_custom_call.1} parent=1 // loop_footer_branch
      %12 = sbr.rel target = $region3
    $region8: #{tpu_custom_call.1} parent=1 // loop_exit
      _
    %1188 = vsyncpa [#allocation3], 1
    %s1189 = scalar_lea.sflag [#allocation3], 1
    %1190 = vsyncpa %s1189, 1

</llo_original>
